<compile_context>
chip_gen: v7x
topology: tpu7x:2x2x1
jax: 0.10.0
libtpu: 0.0.40
codegen_flags: <defaults>
</compile_context>

<pallas_src>
import functools

import jax
import jax.numpy as jnp
from jax import lax
from jax.experimental import pallas as pl
from jax.experimental.pallas import tpu as pltpu


def _layernorm(x, gamma, beta, eps=1e-5):
    # LN math kept in f32 (v5e has no bf16 VPU/EUP).
    x = x.astype(jnp.float32)
    mu = jnp.mean(x, axis=-1, keepdims=True)
    var = jnp.mean((x - mu) ** 2, axis=-1, keepdims=True)
    return (x - mu) * lax.rsqrt(var + eps) * gamma + beta


# --------------------- kernel 1: LN1 + fused QKV projection -------------------
def qkv_kernel(x_ref, g_ref, bt_ref, wqkv_ref, bqkv_ref,
               q_ref, k_ref, v_ref, *, d_model):
    x = x_ref[0]                                          # (tq, D)
    h = _layernorm(x, g_ref[...], bt_ref[...])            # f32 (tq, D)
    hm = h.astype(wqkv_ref.dtype)                         # MXU operand dtype
    # ONE wide matmul (tq,D)x(D,3D) instead of 3*H narrow N=Dh matmuls.
    qkv = jnp.dot(hm, wqkv_ref[...],
                  preferred_element_type=jnp.float32) + bqkv_ref[...]
    # Lane-dense (tq, D) stores (no masked Dh-wide partial stores).
    q_ref[0] = qkv[:, :d_model].astype(q_ref.dtype)       # 1/sqrt(Dh) pre-folded
    k_ref[0] = qkv[:, d_model:2 * d_model].astype(k_ref.dtype)
    v_ref[0] = qkv[:, 2 * d_model:].astype(v_ref.dtype)


# ------- kernel 2: flash attention + Wo + residual + LN2 + SwishGLU FFN ------
def attn_ffn_kernel(qi_tbl, ki_tbl,
                    x_ref, q_ref, k_ref, v_ref, wo_ref, bo_ref,
                    g2_ref, bt2_ref, w1_ref, b1_ref, w2_ref, b2_ref,
                    w3_ref, b3_ref,
                    o_ref, m_sc, l_sc, acc_sc,
                    *, tq, tk, num_heads, head_dim, n_kv, causal, ffn_chunk):
    p = pl.program_id(1)
    qi = qi_tbl[p]                       # q-tile index for this flattened step
    ki = ki_tbl[p]                       # kv-tile index for this flattened step
    d_model = num_heads * head_dim

    if causal:
        # last kv tile overlapping this q tile (schedule contains only valid pairs)
        last_ki = ((qi + 1) * tq - 1) // tk
    else:
        last_ki = n_kv - 1

    @pl.when(ki == 0)
    def _init():
        m_sc[...] = jnp.full(m_sc.shape, -jnp.inf, dtype=m_sc.dtype)
        l_sc[...] = jnp.zeros(l_sc.shape, dtype=l_sc.dtype)
        acc_sc[...] = jnp.zeros(acc_sc.shape, dtype=acc_sc.dtype)

    def heads(ref, t):
        # lane-dense (t, D) -> (H, t, Dh); split/transpose rides the XLU slot.
        return jnp.transpose(ref[0].reshape(t, num_heads, head_dim), (1, 0, 2))

    q = heads(q_ref, tq)                 # (H, tq, Dh), pre-scaled
    k = heads(k_ref, tk)                 # (H, tk, Dh)
    v = heads(v_ref, tk)                 # (H, tk, Dh)

    # Head-batched QK^T; contraction on the last dim (no explicit transpose).
    s = jnp.einsum('hqd,hkd->hqk', q, k,
                   preferred_element_type=jnp.float32)      # (H, tq, tk) f32
    if causal:
        rows = qi * tq + lax.broadcasted_iota(jnp.int32, (tq, tk), 0)
        cols = ki * tk + lax.broadcasted_iota(jnp.int32, (tq, tk), 1)
        # ki==0 tile always has col 0 unmasked per row, so m stays finite.
        s = jnp.where((cols <= rows)[None, :, :], s, -1e30)

    m_cur = jnp.max(s, axis=-1, keepdims=True)               # (H, tq, 1)
    m_new = jnp.maximum(m_sc[...], m_cur)
    alpha = jnp.exp(m_sc[...] - m_new)
    pmat = jnp.exp(s - m_new)
    l_sc[...] = alpha * l_sc[...] + jnp.sum(pmat, axis=-1, keepdims=True)
    acc_sc[...] = alpha * acc_sc[...] + jnp.einsum(
        'hqk,hkd->hqd', pmat.astype(v.dtype), v,
        preferred_element_type=jnp.float32)
    m_sc[...] = m_new

    @pl.when(ki == last_ki)
    def _finalize():
        inv_l = pl.reciprocal(l_sc[...])                     # exact (EUP, cheap)
        ctx = acc_sc[...] * inv_l                            # (H, tq, Dh) f32
        # Pack heads back lane-dense and do ONE deep-K (K=D) output projection.
        ctx = jnp.transpose(ctx, (1, 0, 2)).reshape(tq, d_model)
        ctx = ctx.astype(wo_ref.dtype)
        attn = jnp.dot(ctx, wo_ref[...],
                       preferred_element_type=jnp.float32) + bo_ref[...]
        y = x_ref[0].astype(jnp.float32) + attn              # residual 1

        # --- SwishGLU FFN, F-chunked (bounds a12/gate live intermediates) ---
        h2 = _layernorm(y, g2_ref[...], bt2_ref[...]).astype(w1_ref.dtype)
        ffn_dim = w1_ref.shape[1]
        out = jnp.zeros((tq, d_model), jnp.float32)
        for lo in range(0, ffn_dim, ffn_chunk):
            hi = min(lo + ffn_chunk, ffn_dim)
            a = jnp.dot(h2, w1_ref[:, lo:hi],
                        preferred_element_type=jnp.float32) + b1_ref[:, lo:hi]
            g = jnp.dot(h2, w2_ref[:, lo:hi],
                        preferred_element_type=jnp.float32) + b2_ref[:, lo:hi]
            act = (jax.nn.silu(a) * g).astype(w3_ref.dtype)
            out = out + jnp.dot(act, w3_ref[lo:hi, :],
                                preferred_element_type=jnp.float32)
        out = out + b3_ref[...]
        o_ref[0] = (y + out).astype(o_ref.dtype)             # residual 2


def _const_spec(shape):
    nd = len(shape)
    return pl.BlockSpec(shape, lambda *_: (0,) * nd)


def flash_transformer_layer(x, params, *, num_heads, causal,
                            q_tile=256, kv_tile=256, ffn_chunk=512):
    B, S, D = x.shape
    H = num_heads
    Dh = D // H
    F = 2 * D
    scale = 1.0 / (Dh ** 0.5)

    # ----- host-side (one-time) weight packing; nothing moves in-kernel -----
    wqkv = jnp.concatenate(
        [params["wq"] * scale, params["wk"], params["wv"]], axis=1)      # (D, 3D)
    bqkv = jnp.concatenate(
        [params["bq"] * scale, params["bk"], params["bv"]]).reshape(1, 3 * D)
    wo = params["wo"]                                                    # (D, D)
    bo = params["bo"].reshape(1, D)
    ln1_g = params["ln1_g"].reshape(1, D)
    ln1_b = params["ln1_b"].reshape(1, D)
    ln2_g = params["ln2_g"].reshape(1, D)
    ln2_b = params["ln2_b"].reshape(1, D)
    b1 = params["b1"].reshape(1, F)
    b2 = params["b2"].reshape(1, F)
    b3 = params["b3"].reshape(1, D)

    tq = min(q_tile, S)
    tk = min(kv_tile, S)
    assert S % tq == 0 and S % tk == 0, "seq len must be divisible by tile sizes"

    # ---------------- kernel 1: LN1 + fused QKV projection ----------------
    qkv_shape = jax.ShapeDtypeStruct((B, S, D), x.dtype)
    seq_spec = pl.BlockSpec((1, tq, D), lambda b, si: (b, si, 0))
    q, k, v = pl.pallas_call(
        functools.partial(qkv_kernel, d_model=D),
        out_shape=(qkv_shape, qkv_shape, qkv_shape),
        grid=(B, S // tq),
        in_specs=[
            seq_spec,
            _const_spec((1, D)), _const_spec((1, D)),         # LN1 gamma/beta
            _const_spec((D, 3 * D)), _const_spec((1, 3 * D)),  # fused Wqkv/bqkv
        ],
        out_specs=(seq_spec, seq_spec, seq_spec),
        compiler_params=pltpu.CompilerParams(
            dimension_semantics=("parallel", "parallel")),
    )(x, ln1_g, ln1_b, wqkv, bqkv)

    # --- flattened, causally-pruned (qi, ki) schedule (scalar prefetch) ---
    n_q, n_kv = S // tq, S // tk
    qi_list, ki_list = [], []
    for qi in range(n_q):
        k_last = ((qi + 1) * tq - 1) // tk if causal else n_kv - 1
        for ki in range(k_last + 1):
            qi_list.append(qi)
            ki_list.append(ki)
    qi_tbl = jnp.asarray(qi_list, dtype=jnp.int32)
    ki_tbl = jnp.asarray(ki_list, dtype=jnp.int32)
    n_steps = len(qi_list)

    q_spec = pl.BlockSpec((1, tq, D), lambda b, p, qt, kt: (b, qt[p], 0))
    kv_spec = pl.BlockSpec((1, tk, D), lambda b, p, qt, kt: (b, kt[p], 0))

    # ----- kernel 2: flash attention + Wo + residual + LN2 + SwishGLU FFN -----
    out = pl.pallas_call(
        functools.partial(attn_ffn_kernel, tq=tq, tk=tk, num_heads=H,
                          head_dim=Dh, n_kv=n_kv, causal=causal,
                          ffn_chunk=min(ffn_chunk, F)),
        out_shape=jax.ShapeDtypeStruct((B, S, D), x.dtype),
        grid_spec=pltpu.PrefetchScalarGridSpec(
            num_scalar_prefetch=2,
            grid=(B, n_steps),
            in_specs=[
                q_spec,                                       # x (residual)
                q_spec,                                       # q (lane-dense)
                kv_spec,                                      # k
                kv_spec,                                      # v
                _const_spec((D, D)), _const_spec((1, D)),     # Wo, bo
                _const_spec((1, D)), _const_spec((1, D)),     # LN2 gamma/beta
                _const_spec((D, F)), _const_spec((1, F)),     # W1, b1
                _const_spec((D, F)), _const_spec((1, F)),     # W2, b2
                _const_spec((F, D)), _const_spec((1, D)),     # W3, b3
            ],
            out_specs=q_spec,
            scratch_shapes=[
                pltpu.VMEM((H, tq, 1), jnp.float32),          # running max m
                pltpu.VMEM((H, tq, 1), jnp.float32),          # running sum l
                pltpu.VMEM((H, tq, Dh), jnp.float32),         # running context acc
            ]),
        compiler_params=pltpu.CompilerParams(
            dimension_semantics=("parallel", "arbitrary")),
    )(qi_tbl, ki_tbl, x, q, k, v, wo, bo, ln2_g, ln2_b,
      params["w1"], b1, params["w2"], b2, params["w3"], b3)
    return out


# ------------------------- pure-JAX reference (check) ------------------------
def reference_forward(x, p, *, num_heads, causal):
    B, S, D = x.shape
    H = num_heads
    Dh = D // H
    h = _layernorm(x, p["ln1_g"], p["ln1_b"])

    def heads(w, b):
        t = jnp.einsum("bsd,de->bse", h, w) + b
        return t.reshape(B, S, H, Dh).transpose(0, 2, 1, 3)

    q = heads(p["wq"], p["bq"])
    k = heads(p["wk"], p["bk"])
    v = heads(p["wv"], p["bv"])
    s = jnp.einsum("bhqd,bhkd->bhqk", q, k) / (Dh ** 0.5)
    if causal:
        mask = jnp.tril(jnp.ones((S, S), bool))
        s = jnp.where(mask[None, None], s, -1e30)
    pm = jax.nn.softmax(s, axis=-1)
    ctx = jnp.einsum("bhqk,bhkd->bhqd", pm, v).transpose(0, 2, 1, 3).reshape(B, S, D)
    x = x + jnp.einsum("bsd,de->bse", ctx, p["wo"]) + p["bo"]

    h2 = _layernorm(x, p["ln2_g"], p["ln2_b"])
    a = jnp.einsum("bsd,df->bsf", h2, p["w1"]) + p["b1"]
    b = jnp.einsum("bsd,df->bsf", h2, p["w2"]) + p["b2"]
    g = jax.nn.silu(a) * b
    return x + jnp.einsum("bsf,fd->bsd", g, p["w3"]) + p["b3"]


if __name__ == "__main__":
    B, S, D, H = 2, 8, 32, 4          # batch, seq (= max_seq_len), hidden, heads
    F = 2 * D
    causal = True

    key = jax.random.PRNGKey(0)
    ks = jax.random.split(key, 12)
    sc = 0.05
    params = {
        "ln1_g": jnp.ones((D,), jnp.float32),
        "ln1_b": jnp.zeros((D,), jnp.float32),
        "wq": sc * jax.random.normal(ks[0], (D, D), jnp.float32),
        "bq": sc * jax.random.normal(ks[1], (D,), jnp.float32),
        "wk": sc * jax.random.normal(ks[2], (D, D), jnp.float32),
        "bk": sc * jax.random.normal(ks[3], (D,), jnp.float32),
        "wv": sc * jax.random.normal(ks[4], (D, D), jnp.float32),
        "bv": sc * jax.random.normal(ks[5], (D,), jnp.float32),
        "wo": sc * jax.random.normal(ks[6], (D, D), jnp.float32),
        "bo": jnp.zeros((D,), jnp.float32),
        "ln2_g": jnp.ones((D,), jnp.float32),
        "ln2_b": jnp.zeros((D,), jnp.float32),
        "w1": sc * jax.random.normal(ks[7], (D, F), jnp.float32),
        "b1": sc * jax.random.normal(ks[8], (F,), jnp.float32),
        "w2": sc * jax.random.normal(ks[9], (D, F), jnp.float32),
        "b2": sc * jax.random.normal(ks[10], (F,), jnp.float32),
        "w3": sc * jax.random.normal(ks[11], (F, D), jnp.float32),
        "b3": jnp.zeros((D,), jnp.float32),
    }

    x = jax.random.normal(jax.random.PRNGKey(1), (B, S, D), jnp.float32)

    out = flash_transformer_layer(x, params, num_heads=H, causal=causal)
    out = jax.block_until_ready(out)

    ref = reference_forward(x, params, num_heads=H, causal=causal)
    err = jnp.max(jnp.abs(out - ref))
    assert jnp.allclose(out, ref, atol=2e-3, rtol=2e-3), \
        f"mismatch vs reference (max abs err={err})"

    print("KERNEL_OK")
</pallas_src>

<mosaic_0001>
module attributes {stable_mosaic.version = 11 : i64} {
  func.func @qkv_kernel(%arg0: i32, %arg1: i32, %arg2: memref<1x8x32xf32, #tpu.memory_space<vmem>>, %arg3: memref<1x32xf32, #tpu.memory_space<vmem>>, %arg4: memref<1x32xf32, #tpu.memory_space<vmem>>, %arg5: memref<32x96xf32, #tpu.memory_space<vmem>>, %arg6: memref<1x96xf32, #tpu.memory_space<vmem>>, %arg7: memref<1x8x32xf32, #tpu.memory_space<vmem>>, %arg8: memref<1x8x32xf32, #tpu.memory_space<vmem>>, %arg9: memref<1x8x32xf32, #tpu.memory_space<vmem>>) attributes {dimension_semantics = [#tpu.dimension_semantics<parallel>, #tpu.dimension_semantics<parallel>], iteration_bounds = array<i64: 2, 1>, scalar_prefetch = 0 : i64, scratch_operands = 0 : i64, tpu.core_type = #tpu.core_type<tc>, window_params = [{transform_indices = @transform_0, window_bounds = array<i64: 1, 8, 32>}, {pipeline_mode = #tpu.pipeline_mode<synchronous>, transform_indices = @transform_1, window_bounds = array<i64: 1, 32>}, {pipeline_mode = #tpu.pipeline_mode<synchronous>, transform_indices = @transform_2, window_bounds = array<i64: 1, 32>}, {pipeline_mode = #tpu.pipeline_mode<synchronous>, transform_indices = @transform_3, window_bounds = array<i64: 32, 96>}, {pipeline_mode = #tpu.pipeline_mode<synchronous>, transform_indices = @transform_4, window_bounds = array<i64: 1, 96>}, {transform_indices = @transform_5, window_bounds = array<i64: 1, 8, 32>}, {transform_indices = @transform_6, window_bounds = array<i64: 1, 8, 32>}, {transform_indices = @transform_7, window_bounds = array<i64: 1, 8, 32>}]} {
    %c0 = arith.constant 0 : index
    %c0_0 = arith.constant 0 : index
    %c0_1 = arith.constant 0 : index
    %0 = vector.load %arg2[%c0, %c0_0, %c0_1] : memref<1x8x32xf32, #tpu.memory_space<vmem>>, vector<1x8x32xf32>
    %1 = vector.shape_cast %0 : vector<1x8x32xf32> to vector<8x32xf32>
    %c0_2 = arith.constant 0 : index
    %c0_3 = arith.constant 0 : index
    %2 = vector.load %arg3[%c0_2, %c0_3] : memref<1x32xf32, #tpu.memory_space<vmem>>, vector<1x32xf32>
    %c0_4 = arith.constant 0 : index
    %c0_5 = arith.constant 0 : index
    %3 = vector.load %arg4[%c0_4, %c0_5] : memref<1x32xf32, #tpu.memory_space<vmem>>, vector<1x32xf32>
    %cst = arith.constant dense<0.000000e+00> : vector<8xf32>
    %4 = vector.multi_reduction <add>, %1, %cst [1] : vector<8x32xf32> to vector<8xf32>
    %5 = vector.shape_cast %4 : vector<8xf32> to vector<8x1xf32>
    %cst_6 = arith.constant 3.200000e+01 : f32
    %6 = vector.broadcast %cst_6 : f32 to vector<8x1xf32>
    %7 = arith.divf %5, %6 : vector<8x1xf32>
    %8 = vector.broadcast %7 : vector<8x1xf32> to vector<8x32xf32>
    %9 = arith.subf %1, %8 : vector<8x32xf32>
    %10 = arith.mulf %9, %9 : vector<8x32xf32>
    %cst_7 = arith.constant dense<0.000000e+00> : vector<8xf32>
    %11 = vector.multi_reduction <add>, %10, %cst_7 [1] : vector<8x32xf32> to vector<8xf32>
    %12 = vector.shape_cast %11 : vector<8xf32> to vector<8x1xf32>
    %cst_8 = arith.constant 3.200000e+01 : f32
    %13 = vector.broadcast %cst_8 : f32 to vector<8x1xf32>
    %14 = arith.divf %12, %13 : vector<8x1xf32>
    %15 = vector.broadcast %7 : vector<8x1xf32> to vector<8x32xf32>
    %16 = arith.subf %1, %15 : vector<8x32xf32>
    %cst_9 = arith.constant 9.99999974E-6 : f32
    %17 = vector.broadcast %cst_9 : f32 to vector<8x1xf32>
    %18 = arith.addf %14, %17 : vector<8x1xf32>
    %19 = math.rsqrt %18 : vector<8x1xf32>
    %20 = vector.broadcast %19 : vector<8x1xf32> to vector<8x32xf32>
    %21 = arith.mulf %16, %20 : vector<8x32xf32>
    %22 = vector.broadcast %2 : vector<1x32xf32> to vector<8x32xf32>
    %23 = arith.mulf %21, %22 : vector<8x32xf32>
    %24 = vector.broadcast %3 : vector<1x32xf32> to vector<8x32xf32>
    %25 = arith.addf %23, %24 : vector<8x32xf32>
    %c0_10 = arith.constant 0 : index
    %c0_11 = arith.constant 0 : index
    %26 = vector.load %arg5[%c0_10, %c0_11] : memref<32x96xf32, #tpu.memory_space<vmem>>, vector<32x96xf32>
    %cst_12 = arith.constant dense<0.000000e+00> : vector<8x96xf32>
    %27 = tpu.matmul %25, %26, %cst_12 {dimension_numbers = #tpu.dot_dimension_numbers<[1], [0], [0], [1], [0, 0, 1, 1], [], []>} : vector<8x32xf32>, vector<32x96xf32>, vector<8x96xf32> -> vector<8x96xf32>
    %c0_13 = arith.constant 0 : index
    %c0_14 = arith.constant 0 : index
    %28 = vector.load %arg6[%c0_13, %c0_14] : memref<1x96xf32, #tpu.memory_space<vmem>>, vector<1x96xf32>
    %29 = vector.broadcast %28 : vector<1x96xf32> to vector<8x96xf32>
    %30 = arith.addf %27, %29 : vector<8x96xf32>
    %31 = vector.extract_strided_slice %30 {offsets = [0, 0], sizes = [8, 32], strides = [1, 1]} : vector<8x96xf32> to vector<8x32xf32>
    %c0_15 = arith.constant 0 : index
    %c0_16 = arith.constant 0 : index
    %c0_17 = arith.constant 0 : index
    %32 = vector.load %arg7[%c0_15, %c0_16, %c0_17] : memref<1x8x32xf32, #tpu.memory_space<vmem>>, vector<1x8x32xf32>
    %33 = vector.shape_cast %32 : vector<1x8x32xf32> to vector<8x32xf32>
    %34 = vector.shape_cast %31 : vector<8x32xf32> to vector<1x8x32xf32>
    tpu.vector_store %arg7[%c0_15, %c0_16, %c0_17], %34 {strides = array<i32>} : memref<1x8x32xf32, #tpu.memory_space<vmem>>, vector<1x8x32xf32>,
    %35 = vector.extract_strided_slice %30 {offsets = [0, 32], sizes = [8, 32], strides = [1, 1]} : vector<8x96xf32> to vector<8x32xf32>
    %c0_18 = arith.constant 0 : index
    %c0_19 = arith.constant 0 : index
    %c0_20 = arith.constant 0 : index
    %36 = vector.load %arg8[%c0_18, %c0_19, %c0_20] : memref<1x8x32xf32, #tpu.memory_space<vmem>>, vector<1x8x32xf32>
    %37 = vector.shape_cast %36 : vector<1x8x32xf32> to vector<8x32xf32>
    %38 = vector.shape_cast %35 : vector<8x32xf32> to vector<1x8x32xf32>
    tpu.vector_store %arg8[%c0_18, %c0_19, %c0_20], %38 {strides = array<i32>} : memref<1x8x32xf32, #tpu.memory_space<vmem>>, vector<1x8x32xf32>,
    %39 = vector.extract_strided_slice %30 {offsets = [0, 64], sizes = [8, 32], strides = [1, 1]} : vector<8x96xf32> to vector<8x32xf32>
    %c0_21 = arith.constant 0 : index
    %c0_22 = arith.constant 0 : index
    %c0_23 = arith.constant 0 : index
    %40 = vector.load %arg9[%c0_21, %c0_22, %c0_23] : memref<1x8x32xf32, #tpu.memory_space<vmem>>, vector<1x8x32xf32>
    %41 = vector.shape_cast %40 : vector<1x8x32xf32> to vector<8x32xf32>
    %42 = vector.shape_cast %39 : vector<8x32xf32> to vector<1x8x32xf32>
    tpu.vector_store %arg9[%c0_21, %c0_22, %c0_23], %42 {strides = array<i32>} : memref<1x8x32xf32, #tpu.memory_space<vmem>>, vector<1x8x32xf32>,
    return
  }
  func.func @transform_0(%arg0: i32, %arg1: i32) -> (i32, i32, i32) {
    %c0_i32 = arith.constant 0 : i32
    %c0_i32_0 = arith.constant 0 : i32
    return %arg0, %arg1, %c0_i32 : i32, i32, i32
  }
  func.func @transform_1(%arg0: i32, %arg1: i32) -> (i32, i32) {
    %c0_i32 = arith.constant 0 : i32
    %c0_i32_0 = arith.constant 0 : i32
    %c0_i32_1 = arith.constant 0 : i32
    return %c0_i32, %c0_i32_0 : i32, i32
  }
  func.func @transform_2(%arg0: i32, %arg1: i32) -> (i32, i32) {
    %c0_i32 = arith.constant 0 : i32
    %c0_i32_0 = arith.constant 0 : i32
    %c0_i32_1 = arith.constant 0 : i32
    return %c0_i32, %c0_i32_0 : i32, i32
  }
  func.func @transform_3(%arg0: i32, %arg1: i32) -> (i32, i32) {
    %c0_i32 = arith.constant 0 : i32
    %c0_i32_0 = arith.constant 0 : i32
    %c0_i32_1 = arith.constant 0 : i32
    return %c0_i32, %c0_i32_0 : i32, i32
  }
  func.func @transform_4(%arg0: i32, %arg1: i32) -> (i32, i32) {
    %c0_i32 = arith.constant 0 : i32
    %c0_i32_0 = arith.constant 0 : i32
    %c0_i32_1 = arith.constant 0 : i32
    return %c0_i32, %c0_i32_0 : i32, i32
  }
  func.func @transform_5(%arg0: i32, %arg1: i32) -> (i32, i32, i32) {
    %c0_i32 = arith.constant 0 : i32
    %c0_i32_0 = arith.constant 0 : i32
    return %arg0, %arg1, %c0_i32 : i32, i32, i32
  }
  func.func @transform_6(%arg0: i32, %arg1: i32) -> (i32, i32, i32) {
    %c0_i32 = arith.constant 0 : i32
    %c0_i32_0 = arith.constant 0 : i32
    return %arg0, %arg1, %c0_i32 : i32, i32, i32
  }
  func.func @transform_7(%arg0: i32, %arg1: i32) -> (i32, i32, i32) {
    %c0_i32 = arith.constant 0 : i32
    %c0_i32_0 = arith.constant 0 : i32
    return %arg0, %arg1, %c0_i32 : i32, i32, i32
  }
}

</mosaic_0001>

<llo_original>
// kernel: tpu_custom_call.1
$region0: #{tpu_custom_call.1}
  #allocation0 [shape = 'u32[]', space=smem, size = 0x4, offset = 0x4, fixed_abs, tag = 'smem constant byte address 0x4 - core index']
  #allocation1 [shape = 'u32[144,128]{1,0:T(1,128)}', space=vmem, size = 0x12000, scoped, tag = 'internal scratch']
  %s0 = inlined_call_operand.hbm [shape: f32[2,8,32], index: 0, kind: input, shape index: {}]
  %s1 = inlined_call_operand.vmem [shape: f32[1,32], index: 1, kind: input, shape index: {}]
  %s2 = inlined_call_operand.vmem [shape: f32[1,32], index: 2, kind: input, shape index: {}]
  %s3 = inlined_call_operand.hbm [shape: f32[32,96], index: 3, kind: input, shape index: {}]
  %s4 = inlined_call_operand.vmem [shape: f32[1,96], index: 4, kind: input, shape index: {}]
  %s5 = inlined_call_operand.hbm [shape: f32[2,8,32], index: 5, kind: output, shape index: {0}]
  %s6 = inlined_call_operand.hbm [shape: f32[2,8,32], index: 6, kind: output, shape index: {1}]
  %s7 = inlined_call_operand.hbm [shape: f32[2,8,32], index: 7, kind: output, shape index: {2}]
  %8 = xla_tuple %s5, %s6, %s7
  %s9 = sld [smem:[#allocation0]]
  $region77: #{tpu_custom_call.1} parent=0
    _
  %s11 = ssub.s32 1, %s9
  %s12 = scalar_select 0, %s11, %s9
  $region1: #{tpu_custom_call.1} parent=0
    #allocation2 [shape = 'u8[8192]{0}', space=vmem, size = 0x2000, scoped, tag = 'input window, operand 0']
    #allocation3 [shape = 's32[2]{0}', space=sflag, size = 0x8, scoped, tag = 'scoped memory for tpu_custom_call.1']
    #allocation4 [shape = 's32[2]{0}', space=sflag, size = 0x8, scoped, tag = 'scoped memory for tpu_custom_call.1']
    #allocation5 [shape = 'u8[16384]{0}', space=vmem, size = 0x4000, scoped, tag = 'input window, operand 3, single buffered']
    #allocation6 [shape = 's32[1]{0}', space=sflag, size = 0x4, scoped, tag = 'scoped memory for tpu_custom_call.1']
    #allocation7 [shape = 'u8[8192]{0}', space=vmem, size = 0x2000, scoped, tag = 'output window, operand 0']
    #allocation8 [shape = 'u8[8192]{0}', space=vmem, size = 0x2000, scoped, tag = 'output window, operand 1']
    #allocation9 [shape = 's32[2]{0}', space=sflag, size = 0x8, scoped, tag = 'scoped memory for tpu_custom_call.1']
    #allocation10 [shape = 'u8[8192]{0}', space=vmem, size = 0x2000, scoped, tag = 'output window, operand 2']
    %13 = vsyncpa [#allocation3], 0
    %s14 = scalar_lea.sflag [#allocation3], 1
    %15 = vsyncpa %s14, 0
    %16 = vsyncpa [#allocation6], 0
    %17 = vsyncpa [#allocation4], 0
    %s18 = scalar_lea.sflag [#allocation4], 1
    %19 = vsyncpa %s18, 0
    %20 = vsyncpa [#allocation9], 0
    %s21 = scalar_lea.sflag [#allocation9], 1
    %22 = vsyncpa %s21, 0
    loop: start=0, step=1, limit=4
    $region2: #{tpu_custom_call.1} parent=1 // loop_pre_header
      _
    $region3: #{tpu_custom_call.1} parent=1 // loop_header
      %s24 = sphi 0, %s28
      %p25 = scmp.ge.s32.totalorder %s24, 4
      %s31 = sphi 0, %s43
      %s32 = sphi 0, %s39
      %s33 = sphi 0, %s31
      %s34 = sphi 0, %s32
      %s35 = sphi 0, %s33
      %s36 = sphi 0, %s34
      %s48 = sphi 0, %s50
      %s51 = sphi 0, %s48
      %s52 = sphi 0, %s51
      %s68 = sphi 0, %s52
      %s72 = sphi 0, %s72
      %s74 = sphi 0, %s72
      %s75 = sphi 0, %s74
      %s89 = sphi 0, %s75
      %s93 = sphi 0, %s93
      %s95 = sphi 0, %s93
      %s96 = sphi 0, %s95
      %s110 = sphi 0, %s96
      %s114 = sphi 0, %s114
      %s116 = sphi 0, %s114
      %s117 = sphi 0, %s116
      %s131 = sphi 0, %s117
      %s135 = sphi 0, %s135
      %s137 = sphi 0, %s135
      %s138 = sphi 0, %s137
      %s152 = sphi 0, %s138
      %s160 = sphi 0, %s162
      %s163 = sphi 0, %s160
      %s164 = sphi 0, %s163
      %s180 = sphi 0, %s164
      %s188 = sphi 0, %s190
      %s191 = sphi 0, %s188
      %s192 = sphi 0, %s191
      %s208 = sphi 0, %s192
      %s216 = sphi 0, %s218
      %s219 = sphi 0, %s216
      %s220 = sphi 0, %s219
      %s236 = sphi 0, %s220
    $region4: #{tpu_custom_call.1} parent=1 // loop_header_branch
      %27 = sbr.rel (%p25) target = $region8
    $region5: #{tpu_custom_call.1} parent=1 // loop_body
      %s29 = ssub.s32 %s24, 1
      %s30 = ssub.s32 %s24, 2
      %s37 = sadd.s32 1, %s32
      %p38 = scmp.ge.s32.totalorder %s37, 1
      %s39 = scalar_select %p38, 0, %s37
      %s40 = sadd.s32 1, %s31
      %s41 = scalar_select %p38, %s40, %s31
      %p42 = scmp.ge.s32.totalorder %s41, 2
      %s43 = scalar_select %p42, 0, %s41
      %s44 = ssub.s32 %s31, %s43
      %s45 = ssub.s32 %s32, %s39
      %s46 = sor.u32 %s44, %s45
      %p47 = scmp.eq.s32.totalorder %s46, 0
      %s49 = sadd.s32 %s48, 1
      %s50 = scalar_select %p47, %s48, %s49
      %p53 = pneg %p47
      %p54 = scmp.eq.s32.totalorder %s24, 1
      %p55 = por %p53, %p54
      %p56 = scmp.ne.s32.totalorder %s48, %s51
      %p57 = scmp.eq.s32.totalorder %s24, 0
      %p58 = por %p56, %p57
      %p59 = scmp.ne.s32.totalorder %s48, %s51
      %p60 = scmp.eq.s32.totalorder %s29, 1
      %p61 = por %p59, %p60
      %p62 = scmp.ne.s32.totalorder %s51, %s52
      %p63 = scmp.eq.s32.totalorder %s29, 0
      %p64 = por %p62, %p63
      %p65 = scmp.ne.s32.totalorder %s51, %s52
      %p66 = scmp.eq.s32.totalorder %s30, 1
      %p67 = por %p65, %p66
      %p69 = scmp.ne.s32.totalorder %s52, %s68
      %p70 = scmp.eq.s32.totalorder %s30, 0
      %p71 = por %p69, %p70
      %s73 = sadd.s32 %s72, 1
      %p76 = scmp.eq.s32.totalorder %s24, 1
      %p77 = scmp.ne.s32.totalorder %s72, %s74
      %p78 = scmp.eq.s32.totalorder %s24, 0
      %p79 = por %p77, %p78
      %p80 = scmp.ne.s32.totalorder %s72, %s74
      %p81 = scmp.eq.s32.totalorder %s29, 1
      %p82 = por %p80, %p81
      %p83 = scmp.ne.s32.totalorder %s74, %s75
      %p84 = scmp.eq.s32.totalorder %s29, 0
      %p85 = por %p83, %p84
      %p86 = scmp.ne.s32.totalorder %s74, %s75
      %p87 = scmp.eq.s32.totalorder %s30, 1
      %p88 = por %p86, %p87
      %p90 = scmp.ne.s32.totalorder %s75, %s89
      %p91 = scmp.eq.s32.totalorder %s30, 0
      %p92 = por %p90, %p91
      %s94 = sadd.s32 %s93, 1
      %p97 = scmp.eq.s32.totalorder %s24, 1
      %p98 = scmp.ne.s32.totalorder %s93, %s95
      %p99 = scmp.eq.s32.totalorder %s24, 0
      %p100 = por %p98, %p99
      %p101 = scmp.ne.s32.totalorder %s93, %s95
      %p102 = scmp.eq.s32.totalorder %s29, 1
      %p103 = por %p101, %p102
      %p104 = scmp.ne.s32.totalorder %s95, %s96
      %p105 = scmp.eq.s32.totalorder %s29, 0
      %p106 = por %p104, %p105
      %p107 = scmp.ne.s32.totalorder %s95, %s96
      %p108 = scmp.eq.s32.totalorder %s30, 1
      %p109 = por %p107, %p108
      %p111 = scmp.ne.s32.totalorder %s96, %s110
      %p112 = scmp.eq.s32.totalorder %s30, 0
      %p113 = por %p111, %p112
      %s115 = sadd.s32 %s114, 1
      %p118 = scmp.eq.s32.totalorder %s24, 1
      %p119 = scmp.ne.s32.totalorder %s114, %s116
      %p120 = scmp.eq.s32.totalorder %s24, 0
      %p121 = por %p119, %p120
      %p122 = scmp.ne.s32.totalorder %s114, %s116
      %p123 = scmp.eq.s32.totalorder %s29, 1
      %p124 = por %p122, %p123
      %p125 = scmp.ne.s32.totalorder %s116, %s117
      %p126 = scmp.eq.s32.totalorder %s29, 0
      %p127 = por %p125, %p126
      %p128 = scmp.ne.s32.totalorder %s116, %s117
      %p129 = scmp.eq.s32.totalorder %s30, 1
      %p130 = por %p128, %p129
      %p132 = scmp.ne.s32.totalorder %s117, %s131
      %p133 = scmp.eq.s32.totalorder %s30, 0
      %p134 = por %p132, %p133
      %s136 = sadd.s32 %s135, 1
      %p139 = scmp.eq.s32.totalorder %s24, 1
      %p140 = scmp.ne.s32.totalorder %s135, %s137
      %p141 = scmp.eq.s32.totalorder %s24, 0
      %p142 = por %p140, %p141
      %p143 = scmp.ne.s32.totalorder %s135, %s137
      %p144 = scmp.eq.s32.totalorder %s29, 1
      %p145 = por %p143, %p144
      %p146 = scmp.ne.s32.totalorder %s137, %s138
      %p147 = scmp.eq.s32.totalorder %s29, 0
      %p148 = por %p146, %p147
      %p149 = scmp.ne.s32.totalorder %s137, %s138
      %p150 = scmp.eq.s32.totalorder %s30, 1
      %p151 = por %p149, %p150
      %p153 = scmp.ne.s32.totalorder %s138, %s152
      %p154 = scmp.eq.s32.totalorder %s30, 0
      %p155 = por %p153, %p154
      %s156 = ssub.s32 %s31, %s43
      %s157 = ssub.s32 %s32, %s39
      %s158 = sor.u32 %s156, %s157
      %p159 = scmp.eq.s32.totalorder %s158, 0
      %s161 = sadd.s32 %s160, 1
      %s162 = scalar_select %p159, %s160, %s161
      %p165 = pneg %p159
      %p166 = scmp.eq.s32.totalorder %s24, 1
      %p167 = por %p165, %p166
      %p168 = scmp.ne.s32.totalorder %s160, %s163
      %p169 = scmp.eq.s32.totalorder %s24, 0
      %p170 = por %p168, %p169
      %p171 = scmp.ne.s32.totalorder %s160, %s163
      %p172 = scmp.eq.s32.totalorder %s29, 1
      %p173 = por %p171, %p172
      %p174 = scmp.ne.s32.totalorder %s163, %s164
      %p175 = scmp.eq.s32.totalorder %s29, 0
      %p176 = por %p174, %p175
      %p177 = scmp.ne.s32.totalorder %s163, %s164
      %p178 = scmp.eq.s32.totalorder %s30, 1
      %p179 = por %p177, %p178
      %p181 = scmp.ne.s32.totalorder %s164, %s180
      %p182 = scmp.eq.s32.totalorder %s30, 0
      %p183 = por %p181, %p182
      %s184 = ssub.s32 %s31, %s43
      %s185 = ssub.s32 %s32, %s39
      %s186 = sor.u32 %s184, %s185
      %p187 = scmp.eq.s32.totalorder %s186, 0
      %s189 = sadd.s32 %s188, 1
      %s190 = scalar_select %p187, %s188, %s189
      %p193 = pneg %p187
      %p194 = scmp.eq.s32.totalorder %s24, 1
      %p195 = por %p193, %p194
      %p196 = scmp.ne.s32.totalorder %s188, %s191
      %p197 = scmp.eq.s32.totalorder %s24, 0
      %p198 = por %p196, %p197
      %p199 = scmp.ne.s32.totalorder %s188, %s191
      %p200 = scmp.eq.s32.totalorder %s29, 1
      %p201 = por %p199, %p200
      %p202 = scmp.ne.s32.totalorder %s191, %s192
      %p203 = scmp.eq.s32.totalorder %s29, 0
      %p204 = por %p202, %p203
      %p205 = scmp.ne.s32.totalorder %s191, %s192
      %p206 = scmp.eq.s32.totalorder %s30, 1
      %p207 = por %p205, %p206
      %p209 = scmp.ne.s32.totalorder %s192, %s208
      %p210 = scmp.eq.s32.totalorder %s30, 0
      %p211 = por %p209, %p210
      %s212 = ssub.s32 %s31, %s43
      %s213 = ssub.s32 %s32, %s39
      %s214 = sor.u32 %s212, %s213
      %p215 = scmp.eq.s32.totalorder %s214, 0
      %s217 = sadd.s32 %s216, 1
      %s218 = scalar_select %p215, %s216, %s217
      %p221 = pneg %p215
      %p222 = scmp.eq.s32.totalorder %s24, 1
      %p223 = por %p221, %p222
      %p224 = scmp.ne.s32.totalorder %s216, %s219
      %p225 = scmp.eq.s32.totalorder %s24, 0
      %p226 = por %p224, %p225
      %p227 = scmp.ne.s32.totalorder %s216, %s219
      %p228 = scmp.eq.s32.totalorder %s29, 1
      %p229 = por %p227, %p228
      %p230 = scmp.ne.s32.totalorder %s219, %s220
      %p231 = scmp.eq.s32.totalorder %s29, 0
      %p232 = por %p230, %p231
      %p233 = scmp.ne.s32.totalorder %s219, %s220
      %p234 = scmp.eq.s32.totalorder %s30, 1
      %p235 = por %p233, %p234
      %p237 = scmp.ne.s32.totalorder %s220, %s236
      %p238 = scmp.eq.s32.totalorder %s30, 0
      %p239 = por %p237, %p238
      %p240 = scmp.le.s32.totalorder 1, %s24
      %p241 = scmp.lt.s32.totalorder %s24, 3
      %p242 = pnand %p240, %p241
      %p243 = pneg %p242
      // Predicated region
      $region9: #{tpu_custom_call.1} parent=5 // pred_check
        _
      $region10: #{tpu_custom_call.1} parent=5 // pred_check_branch
        %245 = sbr.rel (%p242) target = $region12
      $region11: #{tpu_custom_call.1} parent=5 // pred_region
        %s246 = ssub.s32 %s24, 1
        // Predicated region
        $region13: #{tpu_custom_call.1} parent=11 // pred_check
          %p247 = pneg %p85
        $region14: #{tpu_custom_call.1} parent=11 // pred_check_branch
          %249 = sbr.rel (%p247) target = $region16
        $region15: #{tpu_custom_call.1} parent=11 // pred_region
          _
        $region16: #{tpu_custom_call.1} parent=11 // pred_fallthru
          _
        // Predicated region
        $region17: #{tpu_custom_call.1} parent=11 // pred_check
          %p250 = pneg %p106
        $region18: #{tpu_custom_call.1} parent=11 // pred_check_branch
          %252 = sbr.rel (%p250) target = $region20
        $region19: #{tpu_custom_call.1} parent=11 // pred_region
          _
        $region20: #{tpu_custom_call.1} parent=11 // pred_fallthru
          _
        // Predicated region
        $region21: #{tpu_custom_call.1} parent=11 // pred_check
          %p253 = pneg %p127
        $region22: #{tpu_custom_call.1} parent=11 // pred_check_branch
          %255 = sbr.rel (%p253) target = $region24
        $region23: #{tpu_custom_call.1} parent=11 // pred_region
          %s257 = ssub.s32 512, 512
          %258 = vsyncadd [#allocation6], %s257
          %s259 = sshll.u32 [#allocation5], 4
          %s260 = int_to_ptr.vmem [resolvable:$true] %s259
          %265 = dma.hbm_to_vmem [thread:$0]  %s3, 512, %s260, [#allocation6], 128, 128, 8
        $region24: #{tpu_custom_call.1} parent=11 // pred_fallthru
          _
        // Predicated region
        $region25: #{tpu_custom_call.1} parent=11 // pred_check
          %p266 = pneg %p148
        $region26: #{tpu_custom_call.1} parent=11 // pred_check_branch
          %268 = sbr.rel (%p266) target = $region28
        $region27: #{tpu_custom_call.1} parent=11 // pred_region
          _
        $region28: #{tpu_custom_call.1} parent=11 // pred_fallthru
          _
      $region12: #{tpu_custom_call.1} parent=5 // pred_fallthru
        _
      %p269 = scmp.lt.s32.totalorder %s24, 2
      // Predicated region
      $region29: #{tpu_custom_call.1} parent=5 // pred_check
        %p270 = pneg %p269
      $region30: #{tpu_custom_call.1} parent=5 // pred_check_branch
        %272 = sbr.rel (%p270) target = $region32
      $region31: #{tpu_custom_call.1} parent=5 // pred_region
        // Predicated region
        $region33: #{tpu_custom_call.1} parent=31 // pred_check
          %p273 = pneg %p58
        $region34: #{tpu_custom_call.1} parent=31 // pred_check_branch
          %275 = sbr.rel (%p273) target = $region36
        $region35: #{tpu_custom_call.1} parent=31 // pred_region
          %s276 = sand.u32 %s48, 1
          %s277 = scalar_lea.sflag [#allocation3], %s276
          %s278 = sand.u32 %s48, 1
          %s279 = smul.addr %s278, 8
          %s280 = scalar_lea.vmem [#allocation2], %s279
          %s282 = ssub.s32 128, 128
          %283 = vsyncadd %s277, %s282
          %s284 = sadd.s32 %s32, %s31
          %s285 = smul.addr %s284, 128
          %s286 = scalar_lea.hbm %s0, %s285
          %s288 = sshll.u32 %s280, 4
          %s289 = int_to_ptr.vmem [resolvable:$true] %s288
          %291 = dma.hbm_to_vmem [thread:$0]  %s286, 128, %s289, %s277
        $region36: #{tpu_custom_call.1} parent=31 // pred_fallthru
          _
      $region32: #{tpu_custom_call.1} parent=5 // pred_fallthru
        _
      %p292 = scmp.le.s32.totalorder 1, %s24
      %p293 = scmp.lt.s32.totalorder %s24, 3
      %p294 = pnand %p292, %p293
      %p295 = pneg %p294
      // Predicated region
      $region37: #{tpu_custom_call.1} parent=5 // pred_check
        _
      $region38: #{tpu_custom_call.1} parent=5 // pred_check_branch
        %297 = sbr.rel (%p294) target = $region40
      $region39: #{tpu_custom_call.1} parent=5 // pred_region
        %s298 = ssub.s32 %s24, 1
        %s299 = sand.u32 %s51, 1
        %s300 = scalar_lea.sflag [#allocation3], %s299
        %s301 = sand.u32 %s51, 1
        %s302 = smul.addr %s301, 8
        %s303 = scalar_lea.vmem [#allocation2], %s302
        // Predicated region
        $region41: #{tpu_custom_call.1} parent=39 // pred_check
          %p304 = pneg %p64
        $region42: #{tpu_custom_call.1} parent=39 // pred_check_branch
          %306 = sbr.rel (%p304) target = $region44
        $region43: #{tpu_custom_call.1} parent=39 // pred_region
          %307 = dma.done %s300, 128
        $region44: #{tpu_custom_call.1} parent=39 // pred_fallthru
          _
        // Predicated region
        $region45: #{tpu_custom_call.1} parent=39 // pred_check
          %p308 = pneg %p127
        $region46: #{tpu_custom_call.1} parent=39 // pred_check_branch
          %310 = sbr.rel (%p308) target = $region48
        $region47: #{tpu_custom_call.1} parent=39 // pred_region
          %311 = dma.done [#allocation6], 512
        $region48: #{tpu_custom_call.1} parent=39 // pred_fallthru
          _
        %s312 = sand.u32 %s51, 1
        %s313 = scalar_lea.sflag [#allocation3], %s312
        %s314 = sand.u32 %s51, 1
        %s315 = smul.addr %s314, 8
        %s316 = scalar_lea.vmem [#allocation2], %s315
        %p317 = pneg %p64
        %p318 = pneg %p61
        %p319 = pneg %p85
        %p320 = pneg %p82
        %p321 = pneg %p106
        %p322 = pneg %p103
        %p323 = pneg %p127
        %p324 = pneg %p124
        %p325 = pneg %p148
        %p326 = pneg %p145
        %p327 = pneg %p176
        %p328 = pneg %p173
        %s329 = sand.u32 %s163, 1
        %s330 = scalar_lea.sflag [#allocation4], %s329
        %s331 = sand.u32 %s163, 1
        %s332 = smul.addr %s331, 8
        %s333 = scalar_lea.vmem [#allocation7], %s332
        %p334 = pneg %p204
        %p335 = pneg %p201
        %s336 = sand.u32 %s29, 1
        %s337 = scalar_lea.sflag [#allocation9], %s336
        %s338 = sand.u32 %s191, 1
        %s339 = smul.addr %s338, 8
        %s340 = scalar_lea.vmem [#allocation8], %s339
        %p341 = pneg %p232
        %p342 = pneg %p229
        %s343 = sand.u32 %s29, 1
        %s344 = scalar_lea.sflag [#allocation9], %s343
        %s345 = sand.u32 %s219, 1
        %s346 = smul.addr %s345, 8
        %s347 = scalar_lea.vmem [#allocation10], %s346
        %v348 = vld [vmem:[%s303] sm:$0xff]
        %v349 = vld [vmem:[%s1] sm:$0x1]
        %v350 = vld [vmem:[%s2] sm:$0x1]
        %vm351 = vcmask 261120
        %v352 = vsel %vm351, %v348, 0.0
        %353 = vadd.xlane.f32.xlu0 %v352
        %v354 = vpop.xlane.xlu0 %353
        %v355 = vrcp.pop 32.0
        %v356 = vmul.f32 %v354, %v355
        %v357 = vsub.f32 %v348, %v356
        %v358 = vmul.f32 %v357, %v357
        %v359 = vsel %vm351, %v358, 0.0
        %360 = vadd.xlane.f32.xlu0 %v359
        %v361 = vpop.xlane.xlu0 %360
        %v362 = vmul.f32 %v361, %v355
        %v363 = vadd.f32 %v362, 1e-05
        %v364 = vrsqrt.pop %v363
        %v365 = vmul.f32 %v357, %v364
        %v367 = vlaneseq
        %v368 = vshrl.u32 %v367, 7
        %v369 = vsub.s32 0, %v368
        %v370 = vrot.slane %v349, %v369
        %v372 = vmul.f32 %v365, %v370
        %v374 = vlaneseq
        %v375 = vshrl.u32 %v374, 7
        %v376 = vsub.s32 0, %v375
        %v377 = vrot.slane %v350, %v376
        %v379 = vadd.f32 %v372, %v377
        %v380 = vld [vmem:[#allocation5] sm:$0xff]
        %v381 = vld [vmem:[#allocation5 + $0x8] sm:$0xff]
        %v382 = vld [vmem:[#allocation5 + $0x10] sm:$0xff]
        %v383 = vld [vmem:[#allocation5 + $0x18] sm:$0xff]
        %v384 = vld [vmem:[%s4] sm:$0x1]
        %v386 = vlaneseq
        %v387 = vshrl.u32 %v386, 7
        %v388 = vsub.s32 0, %v387
        %v389 = vrot.slane %v384, %v388
        %v392 = vsel %vm351, %v379, 0
        %394 = vmatprep.subr.mxu0 0.0
        %395 = vmatpush1.msra.mxu0 %v380
        %396 = vmatprep.subr.mxu0 0.0
        %397 = vmatpush1.msra.mxu0 %v381
        %398 = vmatprep.subr.mxu0 0.0
        %399 = vmatpush1.msra.mxu0 %v382
        %400 = vmatprep.subr.mxu0 0.0
        %401 = vmatpush1.msra.mxu0 %v383
        %402 = vmatprep.subr.mxu0 0.0
        %403 = vmatpush1.msra.mxu0 0.0
        %404 = vmatprep.subr.mxu0 0.0
        %405 = vmatpush1.msra.mxu0 0.0
        %406 = vmatprep.subr.mxu0 0.0
        %407 = vmatpush1.msra.mxu0 0.0
        %408 = vmatprep.subr.mxu0 0.0
        %409 = vmatpush1.msra.mxu0 0.0
        %410 = vmatprep.subr.mxu0 0.0
        %411 = vmatpush1.msra.mxu0 0.0
        %412 = vmatprep.subr.mxu0 0.0
        %413 = vmatpush1.msra.mxu0 0.0
        %414 = vmatprep.subr.mxu0 0.0
        %415 = vmatpush1.msra.mxu0 0.0
        %416 = vmatprep.subr.mxu0 0.0
        %417 = vmatpush1.msra.mxu0 0.0
        %418 = vmatprep.subr.mxu0 0.0
        %419 = vmatpush1.msra.mxu0 0.0
        %420 = vmatprep.subr.mxu0 0.0
        %421 = vmatpush1.msra.mxu0 0.0
        %422 = vmatprep.subr.mxu0 0.0
        %423 = vmatpush1.msra.mxu0 0.0
        %424 = vmatprep.subr.mxu0 0.0
        %425 = vmatpush1.msra.mxu0 0.0
        %426 = vmatprep.subr.mxu0 0.0
        %427 = vmatpush1.msra.mxu0 0.0
        %428 = vmatprep.subr.mxu0 0.0
        %429 = vmatpush1.msra.mxu0 0.0
        %430 = vmatprep.subr.mxu0 0.0
        %431 = vmatpush1.msra.mxu0 0.0
        %432 = vmatprep.subr.mxu0 0.0
        %433 = vmatpush1.msra.mxu0 0.0
        %434 = vmatprep.subr.mxu0 0.0
        %435 = vmatpush1.msra.mxu0 0.0
        %436 = vmatprep.subr.mxu0 0.0
        %437 = vmatpush1.msra.mxu0 0.0
        %438 = vmatprep.subr.mxu0 0.0
        %439 = vmatpush1.msra.mxu0 0.0
        %440 = vmatprep.subr.mxu0 0.0
        %441 = vmatpush1.msra.mxu0 0.0
        %442 = vmatprep.subr.mxu0 0.0
        %443 = vmatpush1.msra.mxu0 0.0
        %444 = vmatprep.subr.mxu0 0.0
        %445 = vmatpush1.msra.mxu0 0.0
        %446 = vmatprep.subr.mxu0 0.0
        %447 = vmatpush1.msra.mxu0 0.0
        %448 = vmatprep.subr.mxu0 0.0
        %449 = vmatpush1.msra.mxu0 0.0
        %450 = vmatprep.subr.mxu0 0.0
        %451 = vmatpush1.msra.mxu0 0.0
        %452 = vmatprep.subr.mxu0 0.0
        %453 = vmatpush1.msra.mxu0 0.0
        %454 = vmatprep.subr.mxu0 0.0
        %455 = vmatpush1.msra.mxu0 0.0
        %456 = vmatprep.subr.mxu0 0.0
        %457 = vmatpush1.msra.mxu0 0.0
        %458 = vmatprep.mubr.f32.mxu0 0.0
        %459 = vmatmul.mubr.f32.gmra.mrb[0].mxu0 %v392
        %v460 = vpop.f32.mrb[0].mxu0
        %v461 = vadd.f32 %v389, %v460
        %v462 = vpop.f32.mrb[0].mxu0
        %463 = vdwg.mxu0
        %464 = vst.msk [vmem:[%s333] sm:$0xff] %vm351, %v461
        %466 = vrot.lane.b32.xlu0 %v461, 96
        %v467 = vpop.permute.xlu0 %466
        %469 = vst.msk [vmem:[%s340] sm:$0xff] %vm351, %v467
        %470 = vrot.lane.b32.xlu0 %v461, 64
        %v471 = vpop.permute.xlu0 %470
        %473 = vst.msk [vmem:[%s347] sm:$0xff] %vm351, %v471
        %s474 = sand.u32 %s163, 1
        %s475 = scalar_lea.sflag [#allocation4], %s474
        %s476 = sand.u32 %s163, 1
        %s477 = smul.addr %s476, 8
        %s478 = scalar_lea.vmem [#allocation7], %s477
        %s479 = sand.u32 %s29, 1
        %s480 = scalar_lea.sflag [#allocation9], %s479
        %s481 = sand.u32 %s191, 1
        %s482 = smul.addr %s481, 8
        %s483 = scalar_lea.vmem [#allocation8], %s482
        %s484 = sand.u32 %s29, 1
        %s485 = scalar_lea.sflag [#allocation9], %s484
        %s486 = sand.u32 %s219, 1
        %s487 = smul.addr %s486, 8
        %s488 = scalar_lea.vmem [#allocation10], %s487
        // Predicated region
        $region49: #{tpu_custom_call.1} parent=39 // pred_check
          %p489 = pneg %p173
        $region50: #{tpu_custom_call.1} parent=39 // pred_check_branch
          %491 = sbr.rel (%p489) target = $region52
        $region51: #{tpu_custom_call.1} parent=39 // pred_region
          %s493 = ssub.s32 128, 128
          %494 = vsyncadd %s475, %s493
          %s495 = sadd.s32 %s34, %s33
          %s496 = smul.addr %s495, 128
          %s497 = scalar_lea.hbm %s5, %s496
          %s499 = sshll.u32 %s478, 4
          %s500 = int_to_ptr.vmem [resolvable:$true] %s499
          %502 = dma.vmem_to_hbm [thread:$0]  %s500, 128, %s497, %s475
        $region52: #{tpu_custom_call.1} parent=39 // pred_fallthru
          _
        // Predicated region
        $region53: #{tpu_custom_call.1} parent=39 // pred_check
          %p503 = pneg %p201
        $region54: #{tpu_custom_call.1} parent=39 // pred_check_branch
          %505 = sbr.rel (%p503) target = $region56
        $region55: #{tpu_custom_call.1} parent=39 // pred_region
          %s507 = ssub.s32 128, 128
          %508 = vsyncadd %s480, %s507
          %s509 = sadd.s32 %s34, %s33
          %s510 = smul.addr %s509, 128
          %s511 = scalar_lea.hbm %s6, %s510
          %s513 = sshll.u32 %s483, 4
          %s514 = int_to_ptr.vmem [resolvable:$true] %s513
          %516 = dma.vmem_to_hbm [thread:$0]  %s514, 128, %s511, %s480
        $region56: #{tpu_custom_call.1} parent=39 // pred_fallthru
          _
        // Predicated region
        $region57: #{tpu_custom_call.1} parent=39 // pred_check
          %p517 = pneg %p229
        $region58: #{tpu_custom_call.1} parent=39 // pred_check_branch
          %519 = sbr.rel (%p517) target = $region60
        $region59: #{tpu_custom_call.1} parent=39 // pred_region
          %s521 = ssub.s32 128, 128
          %522 = vsyncadd %s485, %s521
          %s523 = sadd.s32 %s34, %s33
          %s524 = smul.addr %s523, 128
          %s525 = scalar_lea.hbm %s7, %s524
          %s527 = sshll.u32 %s488, 4
          %s528 = int_to_ptr.vmem [resolvable:$true] %s527
          %530 = dma.vmem_to_hbm [thread:$0]  %s528, 128, %s525, %s485
        $region60: #{tpu_custom_call.1} parent=39 // pred_fallthru
          _
      $region40: #{tpu_custom_call.1} parent=5 // pred_fallthru
        _
      %p531 = scmp.le.s32.totalorder 2, %s24
      // Predicated region
      $region61: #{tpu_custom_call.1} parent=5 // pred_check
        %p532 = pneg %p531
      $region62: #{tpu_custom_call.1} parent=5 // pred_check_branch
        %534 = sbr.rel (%p532) target = $region64
      $region63: #{tpu_custom_call.1} parent=5 // pred_region
        %s535 = ssub.s32 %s24, 2
        // Predicated region
        $region65: #{tpu_custom_call.1} parent=63 // pred_check
          %p536 = pneg %p179
        $region66: #{tpu_custom_call.1} parent=63 // pred_check_branch
          %538 = sbr.rel (%p536) target = $region68
        $region67: #{tpu_custom_call.1} parent=63 // pred_region
          %s539 = sand.u32 %s164, 1
          %s540 = scalar_lea.sflag [#allocation4], %s539
          %s541 = sand.u32 %s164, 1
          %s542 = smul.addr %s541, 8
          %s543 = scalar_lea.vmem [#allocation7], %s542
          %544 = dma.done %s540, 128
        $region68: #{tpu_custom_call.1} parent=63 // pred_fallthru
          _
        // Predicated region
        $region69: #{tpu_custom_call.1} parent=63 // pred_check
          %p545 = pneg %p207
        $region70: #{tpu_custom_call.1} parent=63 // pred_check_branch
          %547 = sbr.rel (%p545) target = $region72
        $region71: #{tpu_custom_call.1} parent=63 // pred_region
          %s548 = sand.u32 %s30, 1
          %s549 = scalar_lea.sflag [#allocation9], %s548
          %s550 = sand.u32 %s192, 1
          %s551 = smul.addr %s550, 8
          %s552 = scalar_lea.vmem [#allocation8], %s551
          %553 = dma.done %s549, 128
        $region72: #{tpu_custom_call.1} parent=63 // pred_fallthru
          _
        // Predicated region
        $region73: #{tpu_custom_call.1} parent=63 // pred_check
          %p554 = pneg %p235
        $region74: #{tpu_custom_call.1} parent=63 // pred_check_branch
          %556 = sbr.rel (%p554) target = $region76
        $region75: #{tpu_custom_call.1} parent=63 // pred_region
          %s557 = sand.u32 %s30, 1
          %s558 = scalar_lea.sflag [#allocation9], %s557
          %s559 = sand.u32 %s220, 1
          %s560 = smul.addr %s559, 8
          %s561 = scalar_lea.vmem [#allocation10], %s560
          %562 = dma.done %s558, 128
        $region76: #{tpu_custom_call.1} parent=63 // pred_fallthru
          _
      $region64: #{tpu_custom_call.1} parent=5 // pred_fallthru
        _
    $region6: #{tpu_custom_call.1} parent=1 // loop_footer
      %s28 = sadd.s32 1, %s24
    $region7: #{tpu_custom_call.1} parent=1 // loop_footer_branch
      %23 = sbr.rel target = $region3
    $region8: #{tpu_custom_call.1} parent=1 // loop_exit
      _
    %563 = vsyncpa [#allocation3], 1
    %s564 = scalar_lea.sflag [#allocation3], 1
    %565 = vsyncpa %s564, 1
    %566 = vsyncpa [#allocation6], 1
    %567 = vsyncpa [#allocation4], 1
    %s568 = scalar_lea.sflag [#allocation4], 1
    %569 = vsyncpa %s568, 1
    %570 = vsyncpa [#allocation9], 1
    %s571 = scalar_lea.sflag [#allocation9], 1
    %572 = vsyncpa %s571, 1

</llo_original>
